<compile_context>
chip_gen: v5e
topology: v5e:2x2
jax: 0.10.0
libtpu: 0.0.40
codegen_flags: <defaults>
</compile_context>

<pallas_src>
import functools

import jax
import jax.numpy as jnp
from jax.experimental import pallas as pl
from jax.experimental.pallas import tpu as pltpu

BN_EPS = 1e-5


def _round_up(x, m):
    return (x + m - 1) // m * m


def _kpt_encoder_kernel(n_ref, kpts_ref, small_ref, wmat_ref, out_ref,
                        s1, q1, s2, q2, *, c1, c2, fd, r_vec, r_w3, tile_n):
    p = pl.program_id(0)          # phase axis (sequential)
    j = pl.program_id(1)          # N-tile axis

    # ---- packed per-channel parameters (tiny sub-tile loads, f32) ----------
    w1 = small_ref[0:c1, 0:2]                          # (c1, 2)
    g1 = small_ref[r_vec:r_vec + c1, 0:1]
    be1 = small_ref[r_vec:r_vec + c1, 1:2]
    g2 = small_ref[r_vec:r_vec + c2, 2:3]
    be2 = small_ref[r_vec:r_vec + c2, 3:4]
    b3 = small_ref[r_vec:r_vec + fd, 4:5]

    n_valid = n_ref[0]
    inv_n = 1.0 / n_valid.astype(jnp.float32)

    # Lane-validity mask over the padded keypoint axis.
    col = jax.lax.broadcasted_iota(jnp.int32, (1, tile_n), 1) + j * tile_n
    valid = col < n_valid

    x = kpts_ref[...]                                  # (2, tile_n) f32, lane-dense

    def layer1():
        # Conv1d(2 -> c1, k=1): K=2 -> two VPU broadcast-FMAs (no MXU, no
        # transpose). Conv bias b1 omitted: cancels under BN mean subtraction.
        return w1[:, 0:1] * x[0:1, :] + w1[:, 1:2] * x[1:2, :]   # (c1, tile_n)

    def bn_fold(s_acc, q_acc, gamma, beta):
        mean = s_acc * inv_n
        var = jnp.maximum(q_acc * inv_n - mean * mean, 0.0)   # clamp cancellation
        scale = gamma * jax.lax.rsqrt(var + BN_EPS)
        shift = beta - mean * scale
        return scale, shift

    def masked_stats(h):
        # Single read of h produces both lane reductions (sum, sum of squares).
        hm = jnp.where(valid, h, 0.0)
        return (jnp.sum(hm, axis=-1, keepdims=True),
                jnp.sum(hm * hm, axis=-1, keepdims=True))

    def apply_layer1_bn():
        sc1, sh1 = bn_fold(s1[...], q1[...], g1, be1)
        return jnp.maximum(layer1() * sc1 + sh1, 0.0)

    def layer2(a1):
        w2 = wmat_ref[0:c2, 0:c1]
        return jnp.dot(w2, a1.astype(w2.dtype),
                       preferred_element_type=jnp.float32)     # (c2, tile_n)

    @pl.when(jnp.logical_and(p == 0, j == 0))
    def _():
        s1[...] = jnp.zeros_like(s1)
        q1[...] = jnp.zeros_like(q1)
        s2[...] = jnp.zeros_like(s2)
        q2[...] = jnp.zeros_like(q2)

    # ---- phase 0: layer-1 batch statistics ---------------------------------
    @pl.when(p == 0)
    def _():
        ds, dq = masked_stats(layer1())
        s1[...] += ds
        q1[...] += dq

    # ---- phase 1: layer-2 pre-activation statistics ------------------------
    @pl.when(p == 1)
    def _():
        h2 = layer2(apply_layer1_bn())
        ds, dq = masked_stats(h2)
        s2[...] += ds
        q2[...] += dq

    # ---- phase 2: apply both BNs, final conv, lane-dense store -------------
    @pl.when(p == 2)
    def _():
        h2 = layer2(apply_layer1_bn())
        sc2, sh2 = bn_fold(s2[...], q2[...], g2, be2)
        a2 = jnp.maximum(h2 * sc2 + sh2, 0.0)
        w3 = wmat_ref[r_w3:r_w3 + fd, 0:c2]
        out = jnp.dot(w3, a2.astype(w3.dtype),
                      preferred_element_type=jnp.float32) + b3
        out_ref[...] = out.astype(out_ref.dtype)
    # NOTE: out_ref is only written in phase 2; earlier-phase writebacks of the
    # same HBM block are overwritten by the final phase (revisit is allowed).


def pack_params(params, *, use_bf16_matmul=False):
    """One-time packing into two sublane-concatenated slabs.

    small (f32): rows [w1 (cols 0:2)] then, at an 8-aligned offset,
                 per-channel vectors [g1, be1, g2, be2, b3] in columns 0..4.
    wmat  (f32 or bf16): rows [w2] then, at an 8-aligned offset, [w3]
                 (pre-cast to bf16 for v6e/v7x MXU operands).
    b1/b2 are intentionally excluded (cancel under training-mode BN).
    """
    c1 = params["g1"].shape[0]
    c2 = params["g2"].shape[0]
    fd = params["b3"].shape[0]
    c_max = max(c1, c2, fd)
    r_vec = _round_up(c1, 8)
    r_w3 = _round_up(c2, 8)

    small = jnp.zeros((r_vec + _round_up(c_max, 8), 5), jnp.float32)
    small = small.at[0:c1, 0:2].set(params["w1"].astype(jnp.float32))
    small = small.at[r_vec:r_vec + c1, 0].set(params["g1"][:, 0])
    small = small.at[r_vec:r_vec + c1, 1].set(params["be1"][:, 0])
    small = small.at[r_vec:r_vec + c2, 2].set(params["g2"][:, 0])
    small = small.at[r_vec:r_vec + c2, 3].set(params["be2"][:, 0])
    small = small.at[r_vec:r_vec + fd, 4].set(params["b3"][:, 0])

    wdt = jnp.bfloat16 if use_bf16_matmul else jnp.float32
    wmat = jnp.zeros((r_w3 + _round_up(fd, 8), max(c1, c2)), wdt)
    wmat = wmat.at[0:c2, 0:c1].set(params["w2"].astype(wdt))
    wmat = wmat.at[r_w3:r_w3 + fd, 0:c2].set(params["w3"].astype(wdt))

    return {"small": small, "wmat": wmat, "dims": (c1, c2, fd, r_vec, r_w3)}


def keypoint_encoder(kpts, packed, *, tile_n=512):
    """kpts: (N, 2) float32.  Returns (1, feature_dim, N), as the torch module."""
    n = kpts.shape[0]
    c1, c2, fd, r_vec, r_w3 = packed["dims"]

    tile_n = max(128, _round_up(tile_n, 128))
    n_pad = _round_up(max(n, 1), tile_n)
    nt = n_pad // tile_n

    # Lane-dense (2, N_pad) keypoint layout (one cheap wrapper transpose).
    x = jnp.pad(kpts.astype(jnp.float32), ((0, n_pad - n), (0, 0))).T
    n_arr = jnp.array([n], jnp.int32)

    kernel = functools.partial(_kpt_encoder_kernel, c1=c1, c2=c2, fd=fd,
                               r_vec=r_vec, r_w3=r_w3, tile_n=tile_n)

    grid_spec = pltpu.PrefetchScalarGridSpec(
        num_scalar_prefetch=1,
        grid=(3, nt),
        in_specs=[
            pl.BlockSpec((2, tile_n), lambda p, j, n_ref: (0, j)),
            pl.BlockSpec(packed["small"].shape, lambda p, j, n_ref: (0, 0)),
            pl.BlockSpec(packed["wmat"].shape, lambda p, j, n_ref: (0, 0)),
        ],
        out_specs=pl.BlockSpec((fd, tile_n), lambda p, j, n_ref: (0, j)),
        scratch_shapes=[
            pltpu.VMEM((c1, 1), jnp.float32),   # sum(h1)
            pltpu.VMEM((c1, 1), jnp.float32),   # sum(h1^2)
            pltpu.VMEM((c2, 1), jnp.float32),   # sum(h2)
            pltpu.VMEM((c2, 1), jnp.float32),   # sum(h2^2)
        ],
    )

    # Explicit VMEM budget: double-buffered I/O tiles + resident weight slabs
    # + live-activation headroom; safe on v5e (16 MiB scoped) up to v7x.
    row_bytes = 4 * tile_n
    est = (2 * 2 * row_bytes
           + 2 * fd * row_bytes
           + 4 * packed["small"].shape[0] * 128
           + packed["wmat"].dtype.itemsize * packed["wmat"].shape[0] * 128
           + 4 * (c1 + c2 + fd) * tile_n * 4)
    vmem_limit = int(min(max(2 * est, 4 << 20), 32 << 20))

    out = pl.pallas_call(
        kernel,
        out_shape=jax.ShapeDtypeStruct((fd, n_pad), jnp.float32),
        grid_spec=grid_spec,
        compiler_params=pltpu.CompilerParams(
            # Phase axis is sequential; N axis accumulates BN stats into VMEM
            # scratch, so it is also "arbitrary" (see TODO(synk) re: v7x split).
            dimension_semantics=("arbitrary", "arbitrary"),
            vmem_limit_bytes=vmem_limit),
    )(n_arr, x, packed["small"], packed["wmat"])

    return out[:, :n].reshape(1, fd, n)


def init_params(key, channels):
    """Deterministic init matching the torch module's parameter shapes.
    Conv1d(kernel_size=1) weight (C_out, C_in, 1) stored as (C_out, C_in).
    Last conv bias forced to 0 (nn.init.constant_); BN gamma=1, beta=0.
    """
    params = {}
    n_convs = len(channels) - 1
    for i in range(1, len(channels)):
        c_in, c_out = channels[i - 1], channels[i]
        key, kw, kb = jax.random.split(key, 3)
        bound = 1.0 / jnp.sqrt(jnp.float32(c_in))
        w = jax.random.uniform(kw, (c_out, c_in), jnp.float32, -bound, bound)
        if i == n_convs:
            b = jnp.zeros((c_out, 1), jnp.float32)
        else:
            b = jax.random.uniform(kb, (c_out, 1), jnp.float32, -bound, bound)
        params[f"w{i}"] = w
        params[f"b{i}"] = b
        if i < n_convs:
            params[f"g{i}"] = jnp.ones((c_out, 1), jnp.float32)
            params[f"be{i}"] = jnp.zeros((c_out, 1), jnp.float32)
    return params


def reference_forward(kpts, params):
    """Pure-JAX reference of the torch forward (training-mode BN, with b1/b2)."""
    x = kpts.T.reshape(2, -1).astype(jnp.float32)
    h = params["w1"] @ x + params["b1"]
    m = h.mean(-1, keepdims=True); v = ((h - m) ** 2).mean(-1, keepdims=True)
    h = params["g1"] * (h - m) / jnp.sqrt(v + BN_EPS) + params["be1"]
    h = jnp.maximum(h, 0.0)
    h = params["w2"] @ h + params["b2"]
    m = h.mean(-1, keepdims=True); v = ((h - m) ** 2).mean(-1, keepdims=True)
    h = params["g2"] * (h - m) / jnp.sqrt(v + BN_EPS) + params["be2"]
    h = jnp.maximum(h, 0.0)
    out = params["w3"] @ h + params["b3"]
    return out.reshape(1, out.shape[0], out.shape[1])


if __name__ == "__main__":
    feature_dim = 32
    hidden_layers = [8, 16]               # MLP channels: [2, 8, 16, 32]
    channels = [2] + hidden_layers + [feature_dim]
    n_kpts = 200                          # not a multiple of 128: exercises masking

    key = jax.random.PRNGKey(0)
    key, kp = jax.random.split(key)
    kpts = jax.random.uniform(kp, (n_kpts, 2), jnp.float32) * 100.0  # pixel-ish coords

    params = init_params(key, channels)

    # f32 path (strict comparison against the training-mode reference).
    packed = pack_params(params)
    out = jax.block_until_ready(keypoint_encoder(kpts, packed, tile_n=128))

    ref = reference_forward(kpts, params)
    assert out.shape == (1, feature_dim, n_kpts), out.shape
    max_err = float(jnp.max(jnp.abs(out - ref)))
    assert jnp.allclose(out, ref, atol=1e-3, rtol=1e-3), max_err

    # bf16-MXU path (v6e/v7x production): weights pre-cast at pack time,
    # f32 accumulation / f32 BN statistics / f32 layer-1 and keypoints.
    packed_bf16 = pack_params(params, use_bf16_matmul=True)
    out_bf16 = jax.block_until_ready(keypoint_encoder(kpts, packed_bf16, tile_n=128))
    assert out_bf16.shape == (1, feature_dim, n_kpts)
    assert bool(jnp.all(jnp.isfinite(out_bf16)))

    print("KERNEL_OK")
</pallas_src>

<mosaic_0001>
module attributes {stable_mosaic.version = 11 : i64} {
  func.func @_kpt_encoder_kernel(%arg0: i32, %arg1: i32, %arg2: memref<1xi32, #tpu.memory_space<smem>>, %arg3: memref<2x128xf32, #tpu.memory_space<vmem>>, %arg4: memref<40x5xf32, #tpu.memory_space<vmem>>, %arg5: memref<48x16xf32, #tpu.memory_space<vmem>>, %arg6: memref<32x128xf32, #tpu.memory_space<vmem>>, %arg7: memref<8x1xf32, #tpu.memory_space<vmem>>, %arg8: memref<8x1xf32, #tpu.memory_space<vmem>>, %arg9: memref<16x1xf32, #tpu.memory_space<vmem>>, %arg10: memref<16x1xf32, #tpu.memory_space<vmem>>) attributes {dimension_semantics = [#tpu.dimension_semantics<arbitrary>, #tpu.dimension_semantics<arbitrary>], iteration_bounds = array<i64: 3, 2>, scalar_prefetch = 1 : i64, scratch_operands = 4 : i64, tpu.core_type = #tpu.core_type<tc>, window_params = [{transform_indices = @transform_0, window_bounds = array<i64: 2, 128>}, {pipeline_mode = #tpu.pipeline_mode<synchronous>, transform_indices = @transform_1, window_bounds = array<i64: 40, 5>}, {pipeline_mode = #tpu.pipeline_mode<synchronous>, transform_indices = @transform_2, window_bounds = array<i64: 48, 16>}, {transform_indices = @transform_3, window_bounds = array<i64: 32, 128>}]} {
    %c0 = arith.constant 0 : index
    %c0_0 = arith.constant 0 : index
    %0 = vector.load %arg4[%c0, %c0_0] : memref<40x5xf32, #tpu.memory_space<vmem>>, vector<8x2xf32>
    %c8 = arith.constant 8 : index
    %c0_1 = arith.constant 0 : index
    %1 = vector.load %arg4[%c8, %c0_1] : memref<40x5xf32, #tpu.memory_space<vmem>>, vector<8x1xf32>
    %c8_2 = arith.constant 8 : index
    %c1 = arith.constant 1 : index
    %2 = vector.load %arg4[%c8_2, %c1] : memref<40x5xf32, #tpu.memory_space<vmem>>, vector<8x1xf32>
    %c8_3 = arith.constant 8 : index
    %c2 = arith.constant 2 : index
    %3 = vector.load %arg4[%c8_3, %c2] : memref<40x5xf32, #tpu.memory_space<vmem>>, vector<16x1xf32>
    %c8_4 = arith.constant 8 : index
    %c3 = arith.constant 3 : index
    %4 = vector.load %arg4[%c8_4, %c3] : memref<40x5xf32, #tpu.memory_space<vmem>>, vector<16x1xf32>
    %c8_5 = arith.constant 8 : index
    %c4 = arith.constant 4 : index
    %5 = vector.load %arg4[%c8_5, %c4] : memref<40x5xf32, #tpu.memory_space<vmem>>, vector<32x1xf32>
    %c0_6 = arith.constant 0 : index
    %6 = memref.load %arg2[%c0_6] : memref<1xi32, #tpu.memory_space<smem>>
    %7 = arith.sitofp %6 : i32 to f32
    %cst = arith.constant 1.000000e+00 : f32
    %8 = arith.divf %cst, %7 : f32
    %9 = tpu.iota {dimensions = array<i32: 1>} : vector<1x128xi32>
    %c128_i32 = arith.constant 128 : i32
    %10 = arith.muli %arg1, %c128_i32 : i32
    %11 = vector.broadcast %10 : i32 to vector<1x128xi32>
    %12 = arith.addi %9, %11 : vector<1x128xi32>
    %13 = vector.broadcast %6 : i32 to vector<1x128xi32>
    %14 = arith.cmpi slt, %12, %13 : vector<1x128xi32>
    %c0_7 = arith.constant 0 : index
    %c0_8 = arith.constant 0 : index
    %15 = vector.load %arg3[%c0_7, %c0_8] : memref<2x128xf32, #tpu.memory_space<vmem>>, vector<2x128xf32>
    %c0_i32 = arith.constant 0 : i32
    %16 = arith.cmpi eq, %arg0, %c0_i32 : i32
    %c0_i32_9 = arith.constant 0 : i32
    %17 = arith.cmpi eq, %arg1, %c0_i32_9 : i32
    %18 = arith.andi %16, %17 : i1
    %19 = arith.extui %18 : i1 to i32
    %c0_i32_10 = arith.constant 0 : i32
    %20 = arith.cmpi ne, %19, %c0_i32_10 : i32
    scf.if %20 {
      %cst_15 = arith.constant 0.000000e+00 : f32
      %30 = vector.broadcast %cst_15 : f32 to vector<8x1xf32>
      %c0_16 = arith.constant 0 : index
      %c0_17 = arith.constant 0 : index
      %31 = vector.load %arg7[%c0_16, %c0_17] : memref<8x1xf32, #tpu.memory_space<vmem>>, vector<8x1xf32>
      tpu.vector_store %arg7[%c0_16, %c0_17], %30 {strides = array<i32>} : memref<8x1xf32, #tpu.memory_space<vmem>>, vector<8x1xf32>,
      %cst_18 = arith.constant 0.000000e+00 : f32
      %32 = vector.broadcast %cst_18 : f32 to vector<8x1xf32>
      %c0_19 = arith.constant 0 : index
      %c0_20 = arith.constant 0 : index
      %33 = vector.load %arg8[%c0_19, %c0_20] : memref<8x1xf32, #tpu.memory_space<vmem>>, vector<8x1xf32>
      tpu.vector_store %arg8[%c0_19, %c0_20], %32 {strides = array<i32>} : memref<8x1xf32, #tpu.memory_space<vmem>>, vector<8x1xf32>,
      %cst_21 = arith.constant 0.000000e+00 : f32
      %34 = vector.broadcast %cst_21 : f32 to vector<16x1xf32>
      %c0_22 = arith.constant 0 : index
      %c0_23 = arith.constant 0 : index
      %35 = vector.load %arg9[%c0_22, %c0_23] : memref<16x1xf32, #tpu.memory_space<vmem>>, vector<16x1xf32>
      tpu.vector_store %arg9[%c0_22, %c0_23], %34 {strides = array<i32>} : memref<16x1xf32, #tpu.memory_space<vmem>>, vector<16x1xf32>,
      %cst_24 = arith.constant 0.000000e+00 : f32
      %36 = vector.broadcast %cst_24 : f32 to vector<16x1xf32>
      %c0_25 = arith.constant 0 : index
      %c0_26 = arith.constant 0 : index
      %37 = vector.load %arg10[%c0_25, %c0_26] : memref<16x1xf32, #tpu.memory_space<vmem>>, vector<16x1xf32>
      tpu.vector_store %arg10[%c0_25, %c0_26], %36 {strides = array<i32>} : memref<16x1xf32, #tpu.memory_space<vmem>>, vector<16x1xf32>,
    } else {
    }
    %c0_i32_11 = arith.constant 0 : i32
    %21 = arith.cmpi eq, %arg0, %c0_i32_11 : i32
    %22 = arith.extui %21 : i1 to i32
    %c0_i32_12 = arith.constant 0 : i32
    %23 = arith.cmpi ne, %22, %c0_i32_12 : i32
    scf.if %23 {
      %30 = vector.extract_strided_slice %0 {offsets = [0, 0], sizes = [8, 1], strides = [1, 1]} : vector<8x2xf32> to vector<8x1xf32>
      %31 = vector.extract_strided_slice %15 {offsets = [0, 0], sizes = [1, 128], strides = [1, 1]} : vector<2x128xf32> to vector<1x128xf32>
      %32 = vector.broadcast %30 : vector<8x1xf32> to vector<8x128xf32>
      %33 = vector.broadcast %31 : vector<1x128xf32> to vector<8x128xf32>
      %34 = arith.mulf %32, %33 : vector<8x128xf32>
      %35 = vector.extract_strided_slice %0 {offsets = [0, 1], sizes = [8, 1], strides = [1, 1]} : vector<8x2xf32> to vector<8x1xf32>
      %36 = vector.extract_strided_slice %15 {offsets = [1, 0], sizes = [1, 128], strides = [1, 1]} : vector<2x128xf32> to vector<1x128xf32>
      %37 = vector.broadcast %35 : vector<8x1xf32> to vector<8x128xf32>
      %38 = vector.broadcast %36 : vector<1x128xf32> to vector<8x128xf32>
      %39 = arith.mulf %37, %38 : vector<8x128xf32>
      %40 = arith.addf %34, %39 : vector<8x128xf32>
      %cst_15 = arith.constant 0.000000e+00 : f32
      %41 = vector.shape_cast %14 : vector<1x128xi1> to vector<1x128xi1>
      %42 = vector.broadcast %41 : vector<1x128xi1> to vector<8x128xi1>
      %43 = vector.broadcast %cst_15 : f32 to vector<8x128xf32>
      %44 = arith.select %42, %40, %43 : vector<8x128xi1>, vector<8x128xf32>
      %cst_16 = arith.constant dense<0.000000e+00> : vector<8xf32>
      %45 = vector.multi_reduction <add>, %44, %cst_16 [1] : vector<8x128xf32> to vector<8xf32>
      %46 = vector.shape_cast %45 : vector<8xf32> to vector<8x1xf32>
      %47 = arith.mulf %44, %44 : vector<8x128xf32>
      %cst_17 = arith.constant dense<0.000000e+00> : vector<8xf32>
      %48 = vector.multi_reduction <add>, %47, %cst_17 [1] : vector<8x128xf32> to vector<8xf32>
      %49 = vector.shape_cast %48 : vector<8xf32> to vector<8x1xf32>
      %c0_18 = arith.constant 0 : index
      %c0_19 = arith.constant 0 : index
      %50 = vector.load %arg7[%c0_18, %c0_19] : memref<8x1xf32, #tpu.memory_space<vmem>>, vector<8x1xf32>
      %51 = arith.addf %50, %46 : vector<8x1xf32>
      %c0_20 = arith.constant 0 : index
      %c0_21 = arith.constant 0 : index
      %52 = vector.load %arg7[%c0_20, %c0_21] : memref<8x1xf32, #tpu.memory_space<vmem>>, vector<8x1xf32>
      tpu.vector_store %arg7[%c0_20, %c0_21], %51 {strides = array<i32>} : memref<8x1xf32, #tpu.memory_space<vmem>>, vector<8x1xf32>,
      %c0_22 = arith.constant 0 : index
      %c0_23 = arith.constant 0 : index
      %53 = vector.load %arg8[%c0_22, %c0_23] : memref<8x1xf32, #tpu.memory_space<vmem>>, vector<8x1xf32>
      %54 = arith.addf %53, %49 : vector<8x1xf32>
      %c0_24 = arith.constant 0 : index
      %c0_25 = arith.constant 0 : index
      %55 = vector.load %arg8[%c0_24, %c0_25] : memref<8x1xf32, #tpu.memory_space<vmem>>, vector<8x1xf32>
      tpu.vector_store %arg8[%c0_24, %c0_25], %54 {strides = array<i32>} : memref<8x1xf32, #tpu.memory_space<vmem>>, vector<8x1xf32>,
    } else {
    }
    %c1_i32 = arith.constant 1 : i32
    %24 = arith.cmpi eq, %arg0, %c1_i32 : i32
    %25 = arith.extui %24 : i1 to i32
    %c0_i32_13 = arith.constant 0 : i32
    %26 = arith.cmpi ne, %25, %c0_i32_13 : i32
    scf.if %26 {
      %c0_15 = arith.constant 0 : index
      %c0_16 = arith.constant 0 : index
      %30 = vector.load %arg7[%c0_15, %c0_16] : memref<8x1xf32, #tpu.memory_space<vmem>>, vector<8x1xf32>
      %c0_17 = arith.constant 0 : index
      %c0_18 = arith.constant 0 : index
      %31 = vector.load %arg8[%c0_17, %c0_18] : memref<8x1xf32, #tpu.memory_space<vmem>>, vector<8x1xf32>
      %32 = vector.broadcast %8 : f32 to vector<8x1xf32>
      %33 = arith.mulf %30, %32 : vector<8x1xf32>
      %34 = vector.broadcast %8 : f32 to vector<8x1xf32>
      %35 = arith.mulf %31, %34 : vector<8x1xf32>
      %36 = arith.mulf %33, %33 : vector<8x1xf32>
      %37 = arith.subf %35, %36 : vector<8x1xf32>
      %cst_19 = arith.constant 0.000000e+00 : f32
      %38 = vector.broadcast %cst_19 : f32 to vector<8x1xf32>
      %39 = arith.maximumf %37, %38 : vector<8x1xf32>
      %cst_20 = arith.constant 9.99999974E-6 : f32
      %40 = vector.broadcast %cst_20 : f32 to vector<8x1xf32>
      %41 = arith.addf %39, %40 : vector<8x1xf32>
      %42 = math.rsqrt %41 : vector<8x1xf32>
      %43 = arith.mulf %1, %42 : vector<8x1xf32>
      %44 = arith.mulf %33, %43 : vector<8x1xf32>
      %45 = arith.subf %2, %44 : vector<8x1xf32>
      %46 = vector.extract_strided_slice %0 {offsets = [0, 0], sizes = [8, 1], strides = [1, 1]} : vector<8x2xf32> to vector<8x1xf32>
      %47 = vector.extract_strided_slice %15 {offsets = [0, 0], sizes = [1, 128], strides = [1, 1]} : vector<2x128xf32> to vector<1x128xf32>
      %48 = vector.broadcast %46 : vector<8x1xf32> to vector<8x128xf32>
      %49 = vector.broadcast %47 : vector<1x128xf32> to vector<8x128xf32>
      %50 = arith.mulf %48, %49 : vector<8x128xf32>
      %51 = vector.extract_strided_slice %0 {offsets = [0, 1], sizes = [8, 1], strides = [1, 1]} : vector<8x2xf32> to vector<8x1xf32>
      %52 = vector.extract_strided_slice %15 {offsets = [1, 0], sizes = [1, 128], strides = [1, 1]} : vector<2x128xf32> to vector<1x128xf32>
      %53 = vector.broadcast %51 : vector<8x1xf32> to vector<8x128xf32>
      %54 = vector.broadcast %52 : vector<1x128xf32> to vector<8x128xf32>
      %55 = arith.mulf %53, %54 : vector<8x128xf32>
      %56 = arith.addf %50, %55 : vector<8x128xf32>
      %57 = vector.broadcast %43 : vector<8x1xf32> to vector<8x128xf32>
      %58 = arith.mulf %56, %57 : vector<8x128xf32>
      %59 = vector.broadcast %45 : vector<8x1xf32> to vector<8x128xf32>
      %60 = arith.addf %58, %59 : vector<8x128xf32>
      %cst_21 = arith.constant 0.000000e+00 : f32
      %61 = vector.broadcast %cst_21 : f32 to vector<8x128xf32>
      %62 = arith.maximumf %60, %61 : vector<8x128xf32>
      %c0_22 = arith.constant 0 : index
      %c0_23 = arith.constant 0 : index
      %63 = vector.load %arg5[%c0_22, %c0_23] : memref<48x16xf32, #tpu.memory_space<vmem>>, vector<16x8xf32>
      %cst_24 = arith.constant dense<0.000000e+00> : vector<16x128xf32>
      %64 = tpu.matmul %63, %62, %cst_24 {dimension_numbers = #tpu.dot_dimension_numbers<[1], [0], [0], [1], [0, 0, 1, 1], [], []>} : vector<16x8xf32>, vector<8x128xf32>, vector<16x128xf32> -> vector<16x128xf32>
      %cst_25 = arith.constant 0.000000e+00 : f32
      %65 = vector.shape_cast %14 : vector<1x128xi1> to vector<1x128xi1>
      %66 = vector.broadcast %65 : vector<1x128xi1> to vector<16x128xi1>
      %67 = vector.broadcast %cst_25 : f32 to vector<16x128xf32>
      %68 = arith.select %66, %64, %67 : vector<16x128xi1>, vector<16x128xf32>
      %cst_26 = arith.constant dense<0.000000e+00> : vector<16xf32>
      %69 = vector.multi_reduction <add>, %68, %cst_26 [1] : vector<16x128xf32> to vector<16xf32>
      %70 = vector.shape_cast %69 : vector<16xf32> to vector<16x1xf32>
      %71 = arith.mulf %68, %68 : vector<16x128xf32>
      %cst_27 = arith.constant dense<0.000000e+00> : vector<16xf32>
      %72 = vector.multi_reduction <add>, %71, %cst_27 [1] : vector<16x128xf32> to vector<16xf32>
      %73 = vector.shape_cast %72 : vector<16xf32> to vector<16x1xf32>
      %c0_28 = arith.constant 0 : index
      %c0_29 = arith.constant 0 : index
      %74 = vector.load %arg9[%c0_28, %c0_29] : memref<16x1xf32, #tpu.memory_space<vmem>>, vector<16x1xf32>
      %75 = arith.addf %74, %70 : vector<16x1xf32>
      %c0_30 = arith.constant 0 : index
      %c0_31 = arith.constant 0 : index
      %76 = vector.load %arg9[%c0_30, %c0_31] : memref<16x1xf32, #tpu.memory_space<vmem>>, vector<16x1xf32>
      tpu.vector_store %arg9[%c0_30, %c0_31], %75 {strides = array<i32>} : memref<16x1xf32, #tpu.memory_space<vmem>>, vector<16x1xf32>,
      %c0_32 = arith.constant 0 : index
      %c0_33 = arith.constant 0 : index
      %77 = vector.load %arg10[%c0_32, %c0_33] : memref<16x1xf32, #tpu.memory_space<vmem>>, vector<16x1xf32>
      %78 = arith.addf %77, %73 : vector<16x1xf32>
      %c0_34 = arith.constant 0 : index
      %c0_35 = arith.constant 0 : index
      %79 = vector.load %arg10[%c0_34, %c0_35] : memref<16x1xf32, #tpu.memory_space<vmem>>, vector<16x1xf32>
      tpu.vector_store %arg10[%c0_34, %c0_35], %78 {strides = array<i32>} : memref<16x1xf32, #tpu.memory_space<vmem>>, vector<16x1xf32>,
    } else {
    }
    %c2_i32 = arith.constant 2 : i32
    %27 = arith.cmpi eq, %arg0, %c2_i32 : i32
    %28 = arith.extui %27 : i1 to i32
    %c0_i32_14 = arith.constant 0 : i32
    %29 = arith.cmpi ne, %28, %c0_i32_14 : i32
    scf.if %29 {
      %c0_15 = arith.constant 0 : index
      %c0_16 = arith.constant 0 : index
      %30 = vector.load %arg7[%c0_15, %c0_16] : memref<8x1xf32, #tpu.memory_space<vmem>>, vector<8x1xf32>
      %c0_17 = arith.constant 0 : index
      %c0_18 = arith.constant 0 : index
      %31 = vector.load %arg8[%c0_17, %c0_18] : memref<8x1xf32, #tpu.memory_space<vmem>>, vector<8x1xf32>
      %32 = vector.broadcast %8 : f32 to vector<8x1xf32>
      %33 = arith.mulf %30, %32 : vector<8x1xf32>
      %34 = vector.broadcast %8 : f32 to vector<8x1xf32>
      %35 = arith.mulf %31, %34 : vector<8x1xf32>
      %36 = arith.mulf %33, %33 : vector<8x1xf32>
      %37 = arith.subf %35, %36 : vector<8x1xf32>
      %cst_19 = arith.constant 0.000000e+00 : f32
      %38 = vector.broadcast %cst_19 : f32 to vector<8x1xf32>
      %39 = arith.maximumf %37, %38 : vector<8x1xf32>
      %cst_20 = arith.constant 9.99999974E-6 : f32
      %40 = vector.broadcast %cst_20 : f32 to vector<8x1xf32>
      %41 = arith.addf %39, %40 : vector<8x1xf32>
      %42 = math.rsqrt %41 : vector<8x1xf32>
      %43 = arith.mulf %1, %42 : vector<8x1xf32>
      %44 = arith.mulf %33, %43 : vector<8x1xf32>
      %45 = arith.subf %2, %44 : vector<8x1xf32>
      %46 = vector.extract_strided_slice %0 {offsets = [0, 0], sizes = [8, 1], strides = [1, 1]} : vector<8x2xf32> to vector<8x1xf32>
      %47 = vector.extract_strided_slice %15 {offsets = [0, 0], sizes = [1, 128], strides = [1, 1]} : vector<2x128xf32> to vector<1x128xf32>
      %48 = vector.broadcast %46 : vector<8x1xf32> to vector<8x128xf32>
      %49 = vector.broadcast %47 : vector<1x128xf32> to vector<8x128xf32>
      %50 = arith.mulf %48, %49 : vector<8x128xf32>
      %51 = vector.extract_strided_slice %0 {offsets = [0, 1], sizes = [8, 1], strides = [1, 1]} : vector<8x2xf32> to vector<8x1xf32>
      %52 = vector.extract_strided_slice %15 {offsets = [1, 0], sizes = [1, 128], strides = [1, 1]} : vector<2x128xf32> to vector<1x128xf32>
      %53 = vector.broadcast %51 : vector<8x1xf32> to vector<8x128xf32>
      %54 = vector.broadcast %52 : vector<1x128xf32> to vector<8x128xf32>
      %55 = arith.mulf %53, %54 : vector<8x128xf32>
      %56 = arith.addf %50, %55 : vector<8x128xf32>
      %57 = vector.broadcast %43 : vector<8x1xf32> to vector<8x128xf32>
      %58 = arith.mulf %56, %57 : vector<8x128xf32>
      %59 = vector.broadcast %45 : vector<8x1xf32> to vector<8x128xf32>
      %60 = arith.addf %58, %59 : vector<8x128xf32>
      %cst_21 = arith.constant 0.000000e+00 : f32
      %61 = vector.broadcast %cst_21 : f32 to vector<8x128xf32>
      %62 = arith.maximumf %60, %61 : vector<8x128xf32>
      %c0_22 = arith.constant 0 : index
      %c0_23 = arith.constant 0 : index
      %63 = vector.load %arg5[%c0_22, %c0_23] : memref<48x16xf32, #tpu.memory_space<vmem>>, vector<16x8xf32>
      %cst_24 = arith.constant dense<0.000000e+00> : vector<16x128xf32>
      %64 = tpu.matmul %63, %62, %cst_24 {dimension_numbers = #tpu.dot_dimension_numbers<[1], [0], [0], [1], [0, 0, 1, 1], [], []>} : vector<16x8xf32>, vector<8x128xf32>, vector<16x128xf32> -> vector<16x128xf32>
      %c0_25 = arith.constant 0 : index
      %c0_26 = arith.constant 0 : index
      %65 = vector.load %arg9[%c0_25, %c0_26] : memref<16x1xf32, #tpu.memory_space<vmem>>, vector<16x1xf32>
      %c0_27 = arith.constant 0 : index
      %c0_28 = arith.constant 0 : index
      %66 = vector.load %arg10[%c0_27, %c0_28] : memref<16x1xf32, #tpu.memory_space<vmem>>, vector<16x1xf32>
      %67 = vector.broadcast %8 : f32 to vector<16x1xf32>
      %68 = arith.mulf %65, %67 : vector<16x1xf32>
      %69 = vector.broadcast %8 : f32 to vector<16x1xf32>
      %70 = arith.mulf %66, %69 : vector<16x1xf32>
      %71 = arith.mulf %68, %68 : vector<16x1xf32>
      %72 = arith.subf %70, %71 : vector<16x1xf32>
      %cst_29 = arith.constant 0.000000e+00 : f32
      %73 = vector.broadcast %cst_29 : f32 to vector<16x1xf32>
      %74 = arith.maximumf %72, %73 : vector<16x1xf32>
      %cst_30 = arith.constant 9.99999974E-6 : f32
      %75 = vector.broadcast %cst_30 : f32 to vector<16x1xf32>
      %76 = arith.addf %74, %75 : vector<16x1xf32>
      %77 = math.rsqrt %76 : vector<16x1xf32>
      %78 = arith.mulf %3, %77 : vector<16x1xf32>
      %79 = arith.mulf %68, %78 : vector<16x1xf32>
      %80 = arith.subf %4, %79 : vector<16x1xf32>
      %81 = vector.broadcast %78 : vector<16x1xf32> to vector<16x128xf32>
      %82 = arith.mulf %64, %81 : vector<16x128xf32>
      %83 = vector.broadcast %80 : vector<16x1xf32> to vector<16x128xf32>
      %84 = arith.addf %82, %83 : vector<16x128xf32>
      %cst_31 = arith.constant 0.000000e+00 : f32
      %85 = vector.broadcast %cst_31 : f32 to vector<16x128xf32>
      %86 = arith.maximumf %84, %85 : vector<16x128xf32>
      %c16 = arith.constant 16 : index
      %c0_32 = arith.constant 0 : index
      %87 = vector.load %arg5[%c16, %c0_32] : memref<48x16xf32, #tpu.memory_space<vmem>>, vector<32x16xf32>
      %cst_33 = arith.constant dense<0.000000e+00> : vector<32x128xf32>
      %88 = tpu.matmul %87, %86, %cst_33 {dimension_numbers = #tpu.dot_dimension_numbers<[1], [0], [0], [1], [0, 0, 1, 1], [], []>} : vector<32x16xf32>, vector<16x128xf32>, vector<32x128xf32> -> vector<32x128xf32>
      %89 = vector.broadcast %5 : vector<32x1xf32> to vector<32x128xf32>
      %90 = arith.addf %88, %89 : vector<32x128xf32>
      %c0_34 = arith.constant 0 : index
      %c0_35 = arith.constant 0 : index
      %91 = vector.load %arg6[%c0_34, %c0_35] : memref<32x128xf32, #tpu.memory_space<vmem>>, vector<32x128xf32>
      tpu.vector_store %arg6[%c0_34, %c0_35], %90 {strides = array<i32>} : memref<32x128xf32, #tpu.memory_space<vmem>>, vector<32x128xf32>,
    } else {
    }
    return
  }
  func.func @transform_0(%arg0: i32, %arg1: i32, %arg2: memref<1xi32, #tpu.memory_space<smem>>) -> (i32, i32) {
    %c0_i32 = arith.constant 0 : i32
    %c0_i32_0 = arith.constant 0 : i32
    return %c0_i32, %arg1 : i32, i32
  }
  func.func @transform_1(%arg0: i32, %arg1: i32, %arg2: memref<1xi32, #tpu.memory_space<smem>>) -> (i32, i32) {
    %c0_i32 = arith.constant 0 : i32
    %c0_i32_0 = arith.constant 0 : i32
    %c0_i32_1 = arith.constant 0 : i32
    return %c0_i32, %c0_i32_0 : i32, i32
  }
  func.func @transform_2(%arg0: i32, %arg1: i32, %arg2: memref<1xi32, #tpu.memory_space<smem>>) -> (i32, i32) {
    %c0_i32 = arith.constant 0 : i32
    %c0_i32_0 = arith.constant 0 : i32
    %c0_i32_1 = arith.constant 0 : i32
    return %c0_i32, %c0_i32_0 : i32, i32
  }
  func.func @transform_3(%arg0: i32, %arg1: i32, %arg2: memref<1xi32, #tpu.memory_space<smem>>) -> (i32, i32) {
    %c0_i32 = arith.constant 0 : i32
    %c0_i32_0 = arith.constant 0 : i32
    return %c0_i32, %arg1 : i32, i32
  }
}

</mosaic_0001>

<llo_original>
// kernel: tpu_custom_call.1
$region0: #{tpu_custom_call.1}
  #allocation0 [shape = 'u32[]', space=smem, size = 0x4, offset = 0x4, fixed_abs, tag = 'smem constant byte address 0x4 - core index']
  #allocation1 [shape = 'u32[72,128]{1,0:T(1,128)}', space=vmem, size = 0x9000, scoped, tag = 'internal scratch']
  #allocation2 [shape = 'f32[8,1]{1,0:T(8,128)}', space=vmem, size = 0x1000, scoped, tag = 'scratch operand']
  #allocation3 [shape = 'f32[8,1]{1,0:T(8,128)}', space=vmem, size = 0x1000, scoped, tag = 'scratch operand']
  #allocation4 [shape = 'f32[16,1]{1,0:T(8,128)}', space=vmem, size = 0x2000, scoped, tag = 'scratch operand']
  #allocation5 [shape = 'f32[16,1]{1,0:T(8,128)}', space=vmem, size = 0x2000, scoped, tag = 'scratch operand']
  #allocation6 [shape = 's32[1]{0}', space=sflag, size = 0x4, scoped, tag = 'scoped memory for tpu_custom_call.1']
  #allocation7 [shape = 's32[1]{0:T(128)S(6)}', space=smem, size = 0x200, scoped, tag = 'prefetched SMEM operand 0']
  %s0 = inlined_call_operand.<no memory space> [shape: s32[1], index: 0, kind: input, shape index: {}]
  %s1 = inlined_call_operand.vmem [shape: f32[2,256], index: 1, kind: input, shape index: {}]
  %s2 = inlined_call_operand.vmem [shape: f32[40,5], index: 2, kind: input, shape index: {}]
  %s3 = inlined_call_operand.vmem [shape: f32[48,16], index: 3, kind: input, shape index: {}]
  %s4 = inlined_call_operand.hbm [shape: f32[32,256], index: 4, kind: output, shape index: {}]
  %s5 = sld [smem:[#allocation0]]
  $region61: #{tpu_custom_call.1} parent=0
    _
  %s7 = ssub.s32 1, %s5
  %s8 = scalar_select 0, %s7, %s5
  %9 = sst [smem:[#allocation7]] %s0
  $region1: #{tpu_custom_call.1} parent=0
    #allocation8 [shape = 'u8[32768]{0}', space=vmem, size = 0x8000, scoped, tag = 'output window, operand 0']
    #allocation9 [shape = 's32[2]{0}', space=sflag, size = 0x8, scoped, tag = 'scoped memory for tpu_custom_call.1']
    %10 = vsyncpa [#allocation9], 0
    %s11 = scalar_lea.sflag [#allocation9], 1
    %12 = vsyncpa %s11, 0
    loop: start=0, step=1, limit=8
    $region2: #{tpu_custom_call.1} parent=1 // loop_pre_header
      _
    $region3: #{tpu_custom_call.1} parent=1 // loop_header
      %s14 = sphi 0, %s18
      %p15 = scmp.ge.s32.totalorder %s14, 8
      %s21 = sphi 0, %s33
      %s22 = sphi 0, %s29
      %s23 = sphi 0, %s21
      %s24 = sphi 0, %s22
      %s25 = sphi 0, %s23
      %s26 = sphi 0, %s24
      %s36 = sphi 0, %s38
      %s39 = sphi 0, %s36
      %s40 = sphi 0, %s39
      %s56 = sphi 0, %s40
      %s60 = sphi 0, %s60
      %s62 = sphi 0, %s60
      %s63 = sphi 0, %s62
      %s77 = sphi 0, %s63
      %s81 = sphi 0, %s81
      %s83 = sphi 0, %s81
      %s84 = sphi 0, %s83
      %s98 = sphi 0, %s84
      %s104 = sphi 0, %s106
      %s107 = sphi 0, %s104
      %s108 = sphi 0, %s107
      %s124 = sphi 0, %s108
    $region4: #{tpu_custom_call.1} parent=1 // loop_header_branch
      %17 = sbr.rel (%p15) target = $region8
    $region5: #{tpu_custom_call.1} parent=1 // loop_body
      %s19 = ssub.s32 %s14, 1
      %s20 = ssub.s32 %s14, 2
      %s27 = sadd.s32 1, %s22
      %p28 = scmp.ge.s32.totalorder %s27, 2
      %s29 = scalar_select %p28, 0, %s27
      %s30 = sadd.s32 1, %s21
      %s31 = scalar_select %p28, %s30, %s21
      %p32 = scmp.ge.s32.totalorder %s31, 3
      %s33 = scalar_select %p32, 0, %s31
      %s34 = ssub.s32 %s22, %s29
      %p35 = scmp.eq.s32.totalorder %s34, 0
      %s37 = sadd.s32 %s36, 1
      %s38 = scalar_select %p35, %s36, %s37
      %p41 = pneg %p35
      %p42 = scmp.eq.s32.totalorder %s14, 5
      %p43 = por %p41, %p42
      %p44 = scmp.ne.s32.totalorder %s36, %s39
      %p45 = scmp.eq.s32.totalorder %s14, 0
      %p46 = por %p44, %p45
      %p47 = scmp.ne.s32.totalorder %s36, %s39
      %p48 = scmp.eq.s32.totalorder %s19, 5
      %p49 = por %p47, %p48
      %p50 = scmp.ne.s32.totalorder %s39, %s40
      %p51 = scmp.eq.s32.totalorder %s19, 0
      %p52 = por %p50, %p51
      %p53 = scmp.ne.s32.totalorder %s39, %s40
      %p54 = scmp.eq.s32.totalorder %s20, 5
      %p55 = por %p53, %p54
      %p57 = scmp.ne.s32.totalorder %s40, %s56
      %p58 = scmp.eq.s32.totalorder %s20, 0
      %p59 = por %p57, %p58
      %s61 = sadd.s32 %s60, 1
      %p64 = scmp.eq.s32.totalorder %s14, 5
      %p65 = scmp.ne.s32.totalorder %s60, %s62
      %p66 = scmp.eq.s32.totalorder %s14, 0
      %p67 = por %p65, %p66
      %p68 = scmp.ne.s32.totalorder %s60, %s62
      %p69 = scmp.eq.s32.totalorder %s19, 5
      %p70 = por %p68, %p69
      %p71 = scmp.ne.s32.totalorder %s62, %s63
      %p72 = scmp.eq.s32.totalorder %s19, 0
      %p73 = por %p71, %p72
      %p74 = scmp.ne.s32.totalorder %s62, %s63
      %p75 = scmp.eq.s32.totalorder %s20, 5
      %p76 = por %p74, %p75
      %p78 = scmp.ne.s32.totalorder %s63, %s77
      %p79 = scmp.eq.s32.totalorder %s20, 0
      %p80 = por %p78, %p79
      %s82 = sadd.s32 %s81, 1
      %p85 = scmp.eq.s32.totalorder %s14, 5
      %p86 = scmp.ne.s32.totalorder %s81, %s83
      %p87 = scmp.eq.s32.totalorder %s14, 0
      %p88 = por %p86, %p87
      %p89 = scmp.ne.s32.totalorder %s81, %s83
      %p90 = scmp.eq.s32.totalorder %s19, 5
      %p91 = por %p89, %p90
      %p92 = scmp.ne.s32.totalorder %s83, %s84
      %p93 = scmp.eq.s32.totalorder %s19, 0
      %p94 = por %p92, %p93
      %p95 = scmp.ne.s32.totalorder %s83, %s84
      %p96 = scmp.eq.s32.totalorder %s20, 5
      %p97 = por %p95, %p96
      %p99 = scmp.ne.s32.totalorder %s84, %s98
      %p100 = scmp.eq.s32.totalorder %s20, 0
      %p101 = por %p99, %p100
      %s102 = ssub.s32 %s22, %s29
      %p103 = scmp.eq.s32.totalorder %s102, 0
      %s105 = sadd.s32 %s104, 1
      %s106 = scalar_select %p103, %s104, %s105
      %p109 = pneg %p103
      %p110 = scmp.eq.s32.totalorder %s14, 5
      %p111 = por %p109, %p110
      %p112 = scmp.ne.s32.totalorder %s104, %s107
      %p113 = scmp.eq.s32.totalorder %s14, 0
      %p114 = por %p112, %p113
      %p115 = scmp.ne.s32.totalorder %s104, %s107
      %p116 = scmp.eq.s32.totalorder %s19, 5
      %p117 = por %p115, %p116
      %p118 = scmp.ne.s32.totalorder %s107, %s108
      %p119 = scmp.eq.s32.totalorder %s19, 0
      %p120 = por %p118, %p119
      %p121 = scmp.ne.s32.totalorder %s107, %s108
      %p122 = scmp.eq.s32.totalorder %s20, 5
      %p123 = por %p121, %p122
      %p125 = scmp.ne.s32.totalorder %s108, %s124
      %p126 = scmp.eq.s32.totalorder %s20, 0
      %p127 = por %p125, %p126
      %p128 = scmp.le.s32.totalorder 1, %s14
      %p129 = scmp.lt.s32.totalorder %s14, 7
      %p130 = pnand %p128, %p129
      %p131 = pneg %p130
      // Predicated region
      $region9: #{tpu_custom_call.1} parent=5 // pred_check
        _
      $region10: #{tpu_custom_call.1} parent=5 // pred_check_branch
        %133 = sbr.rel (%p130) target = $region12
      $region11: #{tpu_custom_call.1} parent=5 // pred_region
        %s134 = ssub.s32 %s14, 1
        // Predicated region
        $region13: #{tpu_custom_call.1} parent=11 // pred_check
          %p135 = pneg %p73
        $region14: #{tpu_custom_call.1} parent=11 // pred_check_branch
          %137 = sbr.rel (%p135) target = $region16
        $region15: #{tpu_custom_call.1} parent=11 // pred_region
          _
        $region16: #{tpu_custom_call.1} parent=11 // pred_fallthru
          _
        // Predicated region
        $region17: #{tpu_custom_call.1} parent=11 // pred_check
          %p138 = pneg %p94
        $region18: #{tpu_custom_call.1} parent=11 // pred_check_branch
          %140 = sbr.rel (%p138) target = $region20
        $region19: #{tpu_custom_call.1} parent=11 // pred_region
          _
        $region20: #{tpu_custom_call.1} parent=11 // pred_fallthru
          _
      $region12: #{tpu_custom_call.1} parent=5 // pred_fallthru
        _
      %p141 = scmp.lt.s32.totalorder %s14, 6
      // Predicated region
      $region21: #{tpu_custom_call.1} parent=5 // pred_check
        %p142 = pneg %p141
      $region22: #{tpu_custom_call.1} parent=5 // pred_check_branch
        %144 = sbr.rel (%p142) target = $region24
      $region23: #{tpu_custom_call.1} parent=5 // pred_region
        // Predicated region
        $region25: #{tpu_custom_call.1} parent=23 // pred_check
          %p145 = pneg %p46
        $region26: #{tpu_custom_call.1} parent=23 // pred_check_branch
          %147 = sbr.rel (%p145) target = $region28
        $region27: #{tpu_custom_call.1} parent=23 // pred_region
          %p148 = scmp.lt.s32.totalorder %s22, 1
          %s149 = scalar_select %p148, %s22, 1
          %s150 = smul.addr %s149, 2
          %s151 = scalar_lea.vmem %s1, %s150
        $region28: #{tpu_custom_call.1} parent=23 // pred_fallthru
          _
      $region24: #{tpu_custom_call.1} parent=5 // pred_fallthru
        _
      %p152 = scmp.le.s32.totalorder 1, %s14
      %p153 = scmp.lt.s32.totalorder %s14, 7
      %p154 = pnand %p152, %p153
      %p155 = pneg %p154
      // Predicated region
      $region29: #{tpu_custom_call.1} parent=5 // pred_check
        _
      $region30: #{tpu_custom_call.1} parent=5 // pred_check_branch
        %157 = sbr.rel (%p154) target = $region32
      $region31: #{tpu_custom_call.1} parent=5 // pred_region
        %s158 = ssub.s32 %s14, 1
        %p159 = scmp.lt.s32.totalorder %s24, 1
        %s160 = scalar_select %p159, %s24, 1
        %s161 = smul.addr %s160, 2
        %s162 = scalar_lea.vmem %s1, %s161
        %p163 = pneg %p52
        %p164 = pneg %p49
        %p165 = pneg %p73
        %p166 = pneg %p70
        %p167 = pneg %p94
        %p168 = pneg %p91
        %p169 = pneg %p120
        %p170 = pneg %p117
        %s171 = sand.u32 %s107, 1
        %s172 = scalar_lea.sflag [#allocation9], %s171
        %s173 = sand.u32 %s107, 1
        %s174 = smul.addr %s173, 32
        %s175 = scalar_lea.vmem [#allocation8], %s174
        %p176 = scmp.lt.s32.totalorder %s24, 1
        %s177 = scalar_select %p176, %s24, 1
        %s178 = smul.addr %s177, 2
        %s179 = scalar_lea.vmem %s1, %s178
        %v180 = vld [vmem:[%s2] sm:$0xff]
        %v181 = vld [vmem:[%s2 + $0x8] sm:$0xff]
        %v182 = vld [vmem:[%s2 + $0x10] sm:$0xff]
        %v183 = vld [vmem:[%s2 + $0x18] sm:$0xff]
        %v184 = vld [vmem:[%s2 + $0x20] sm:$0xff]
        %s185 = sld [smem:[#allocation7]]
        %s186 = scvt.s32.f32 %s185
        %v187 = vstv %s186
        %v188 = vrcp.pop %v187
        %v189 = vmul.f32 %v187, %v188
        %v190 = vsub.f32 1.0, %v189
        %v191 = vmul.f32 %v188, %v190
        %v192 = vadd.f32 %v188, %v191
        %vm193 = vweird.f32 %v187
        %vm194 = vweird.f32 %v188
        %vm195 = vmor %vm193, %vm194
        %v196 = vsel %vm195, %v188, %v192
        %v197 = vand.u32 2147483647, %v187
        %vm198 = vcmp.eq.f32.partialorder %v197, 8.507059e+37
        %v199 = vand.u32 %v187, 2147483648
        %v200 = vor.u32 1.1754944e-38, %v199
        %v201 = vsel %vm198, %v200, %v196
        %s202 = vtos %v201
        %v203 = vlaneseq
        %v204 = vand.u32 %v203, 127
        %s205 = smul.u32 %s24, 128
        %v206 = vstv %s205
        %v207 = vadd.s32 %v204, %v206
        %v208 = vstv %s185
        %vm209 = vcmp.lt.s32.totalorder %v207, %v208
        %v210 = vld [vmem:[%s179] sm:$0x3]
        %p211 = scmp.eq.s32.totalorder %s23, 0
        %p212 = scmp.eq.s32.totalorder %s24, 0
        %p213 = pnand %p211, %p212
        %p214 = pneg %p213
        // Predicated region
        $region33: #{tpu_custom_call.1} parent=31 // pred_check
          _
        $region34: #{tpu_custom_call.1} parent=31 // pred_check_branch
          %216 = sbr.rel (%p213) target = $region36
        $region35: #{tpu_custom_call.1} parent=31 // pred_region
          %vm217 = vcmask 7168
          %218 = vst.msk [vmem:[#allocation2] sm:$0xff] %vm217, 0.0
          %219 = vst.msk [vmem:[#allocation3] sm:$0xff] %vm217, 0.0
          %220 = vst.msk [vmem:[#allocation4] sm:$0xff] %vm217, 0.0
          %221 = vst.msk [vmem:[#allocation4 + $0x8] sm:$0xff] %vm217, 0.0
          %222 = vst.msk [vmem:[#allocation5] sm:$0xff] %vm217, 0.0
          %223 = vst.msk [vmem:[#allocation5 + $0x8] sm:$0xff] %vm217, 0.0
        $region36: #{tpu_custom_call.1} parent=31 // pred_fallthru
          _
        // Predicated region
        $region37: #{tpu_custom_call.1} parent=31 // pred_check
          %p224 = pneg %p211
        $region38: #{tpu_custom_call.1} parent=31 // pred_check_branch
          %226 = sbr.rel (%p224) target = $region40
        $region39: #{tpu_custom_call.1} parent=31 // pred_region
          %228 = vset.pattern.permute.xlu0 0
          %229 = vperm.xlu0 %228, %v180
          %v230 = vpop.permute.xlu0 %229
          %v232 = vperm.slane %v210, 0
          %v233 = vmul.f32 %v230, %v232
          %234 = vset.pattern.permute.xlu0 1
          %235 = vperm.xlu0 %234, %v180
          %v236 = vpop.permute.xlu0 %235
          %v238 = vperm.slane %v210, 1
          %v239 = vmul.f32 %v236, %v238
          %v240 = vadd.f32 %v233, %v239
          %v241 = vsel %vm209, 1, 0
          %vm242 = vcmp.eq.s32.totalorder %v241, 1
          %v243 = vsel %vm242, %v240, 0.0
          %244 = vadd.xlane.f32.xlu0 %v243
          %v245 = vpop.xlane.xlu0 %244
          %v246 = vmul.f32 %v243, %v243
          %247 = vadd.xlane.f32.xlu0 %v246
          %v248 = vpop.xlane.xlu0 %247
          %v249 = vld [vmem:[#allocation2] sm:$0xff]
          %v250 = vadd.f32 %v249, %v245
          %vm251 = vcmask 7168
          %252 = vst.msk [vmem:[#allocation2] sm:$0xff] %vm251, %v250
          %v253 = vld [vmem:[#allocation3] sm:$0xff]
          %v254 = vadd.f32 %v253, %v248
          %255 = vst.msk [vmem:[#allocation3] sm:$0xff] %vm251, %v254
        $region40: #{tpu_custom_call.1} parent=31 // pred_fallthru
          _
        %p256 = scmp.eq.s32.totalorder %s23, 1
        // Predicated region
        $region41: #{tpu_custom_call.1} parent=31 // pred_check
          %p257 = pneg %p256
        $region42: #{tpu_custom_call.1} parent=31 // pred_check_branch
          %259 = sbr.rel (%p257) target = $region44
        $region43: #{tpu_custom_call.1} parent=31 // pred_region
          %v260 = vld [vmem:[#allocation2] sm:$0xff]
          %v261 = vld [vmem:[#allocation3] sm:$0xff]
          %v262 = vstv %s202
          %v263 = vmul.f32 %v260, %v262
          %v264 = vmul.f32 %v261, %v262
          %v265 = vmul.f32 %v263, %v263
          %v266 = vsub.f32 %v264, %v265
          %v267 = vmax.f32 %v266, 0.0
          %v268 = vadd.f32 %v267, 1e-05
          %v269 = vrsqrt.pop %v268
          %v270 = vmul.f32 %v269, %v268
          %v271 = vmul.f32 %v270, %v269
          %v272 = vmul.f32 0.5, %v271
          %v273 = vsub.f32 1.5, %v272
          %v274 = vmul.f32 %v269, %v273
          %vm275 = vweird.f32 %v268
          %vm276 = vweird.f32 %v269
          %vm277 = vmor %vm275, %vm276
          %v278 = vsel %vm277, %v269, %v274
          %v279 = vmul.f32 %v181, %v278
          %v280 = vmul.f32 %v263, %v279
          %282 = vrot.lane.b32.xlu0 %v280, 1
          %v283 = vpop.permute.xlu0 %282
          %v285 = vsub.f32 %v181, %v283
          %287 = vset.pattern.permute.xlu0 0
          %288 = vperm.xlu0 %287, %v180
          %v289 = vpop.permute.xlu0 %288
          %v291 = vperm.slane %v210, 0
          %v292 = vmul.f32 %v289, %v291
          %293 = vset.pattern.permute.xlu0 1
          %294 = vperm.xlu0 %293, %v180
          %v295 = vpop.permute.xlu0 %294
          %v297 = vperm.slane %v210, 1
          %v298 = vmul.f32 %v295, %v297
          %v299 = vadd.f32 %v292, %v298
          %301 = vset.pattern.permute.xlu0 0
          %302 = vperm.xlu0 %301, %v279
          %v303 = vpop.permute.xlu0 %302
          %v305 = vmul.f32 %v299, %v303
          %307 = vset.pattern.permute.xlu0 1
          %308 = vperm.xlu0 %307, %v285
          %v309 = vpop.permute.xlu0 %308
          %v311 = vadd.f32 %v305, %v309
          %v312 = vmax.f32 %v311, 0.0
          %v313 = vld [vmem:[%s3] sm:$0xff]
          %v314 = vld [vmem:[%s3 + $0x8] sm:$0xff]
          %vm315 = vcmask 64512
          %v317 = vsel %vm315, %v313, 0
          %v320 = vsel %vm315, %v314, 0
          %322 = vmatpush.msra.mxu0 0.0
          %323 = vmatpush.msra.mxu0 0.0
          %324 = vmatpush.msra.mxu0 0.0
          %325 = vmatpush.msra.mxu0 0.0
          %326 = vmatpush.msra.mxu0 0.0
          %327 = vmatpush.msra.mxu0 0.0
          %328 = vmatpush.msra.mxu0 0.0
          %329 = vmatpush.msra.mxu0 0.0
          %330 = vmatpush.msra.mxu0 0.0
          %331 = vmatpush.msra.mxu0 0.0
          %332 = vmatpush.msra.mxu0 0.0
          %333 = vmatpush.msra.mxu0 0.0
          %334 = vmatpush.msra.mxu0 0.0
          %335 = vmatpush.msra.mxu0 0.0
          %336 = vmatpush.msra.mxu0 0.0
          %337 = vmatpush.msra.mxu0 %v312
          %338 = vmatmul.f32.gmra.mxu0 %v317
          %v339 = vpop.f32.mrf.mxu0
          %v340 = vadd.f32 0.0, %v339
          %341 = vmatmul.f32.gmra.mxu0 %v320
          %v342 = vpop.f32.mrf.mxu0
          %v343 = vadd.f32 0.0, %v342
          %344 = vdwg.mxu0
          %v345 = vsel %vm209, 1, 0
          %vm346 = vcmp.eq.s32.totalorder %v345, 1
          %v347 = vsel %vm346, %v340, 0.0
          %v348 = vsel %vm346, %v343, 0.0
          %349 = vadd.xlane.f32.xlu0 %v347
          %v350 = vpop.xlane.xlu0 %349
          %351 = vadd.xlane.f32.xlu0 %v348
          %v352 = vpop.xlane.xlu0 %351
          %v353 = vmul.f32 %v347, %v347
          %v354 = vmul.f32 %v348, %v348
          %355 = vadd.xlane.f32.xlu0 %v353
          %v356 = vpop.xlane.xlu0 %355
          %357 = vadd.xlane.f32.xlu0 %v354
          %v358 = vpop.xlane.xlu0 %357
          %v359 = vld [vmem:[#allocation4] sm:$0xff]
          %v360 = vld [vmem:[#allocation4 + $0x8] sm:$0xff]
          %v361 = vadd.f32 %v359, %v350
          %v362 = vadd.f32 %v360, %v352
          %vm363 = vcmask 7168
          %364 = vst.msk [vmem:[#allocation4] sm:$0xff] %vm363, %v361
          %365 = vst.msk [vmem:[#allocation4 + $0x8] sm:$0xff] %vm363, %v362
          %v366 = vld [vmem:[#allocation5] sm:$0xff]
          %v367 = vld [vmem:[#allocation5 + $0x8] sm:$0xff]
          %v368 = vadd.f32 %v366, %v356
          %v369 = vadd.f32 %v367, %v358
          %370 = vst.msk [vmem:[#allocation5] sm:$0xff] %vm363, %v368
          %371 = vst.msk [vmem:[#allocation5 + $0x8] sm:$0xff] %vm363, %v369
        $region44: #{tpu_custom_call.1} parent=31 // pred_fallthru
          _
        %p372 = scmp.eq.s32.totalorder %s23, 2
        // Predicated region
        $region45: #{tpu_custom_call.1} parent=31 // pred_check
          %p373 = pneg %p372
        $region46: #{tpu_custom_call.1} parent=31 // pred_check_branch
          %375 = sbr.rel (%p373) target = $region48
        $region47: #{tpu_custom_call.1} parent=31 // pred_region
          %v376 = vld [vmem:[#allocation2] sm:$0xff]
          %v377 = vld [vmem:[#allocation3] sm:$0xff]
          %v378 = vstv %s202
          %v379 = vmul.f32 %v376, %v378
          %v380 = vmul.f32 %v377, %v378
          %v381 = vmul.f32 %v379, %v379
          %v382 = vsub.f32 %v380, %v381
          %v383 = vmax.f32 %v382, 0.0
          %v384 = vadd.f32 %v383, 1e-05
          %v385 = vrsqrt.pop %v384
          %v386 = vmul.f32 %v385, %v384
          %v387 = vmul.f32 %v386, %v385
          %v388 = vmul.f32 0.5, %v387
          %v389 = vsub.f32 1.5, %v388
          %v390 = vmul.f32 %v385, %v389
          %vm391 = vweird.f32 %v384
          %vm392 = vweird.f32 %v385
          %vm393 = vmor %vm391, %vm392
          %v394 = vsel %vm393, %v385, %v390
          %v395 = vmul.f32 %v181, %v394
          %v396 = vmul.f32 %v379, %v395
          %398 = vrot.lane.b32.xlu0 %v396, 1
          %v399 = vpop.permute.xlu0 %398
          %v401 = vsub.f32 %v181, %v399
          %403 = vset.pattern.permute.xlu0 0
          %404 = vperm.xlu0 %403, %v180
          %v405 = vpop.permute.xlu0 %404
          %v407 = vperm.slane %v210, 0
          %v408 = vmul.f32 %v405, %v407
          %409 = vset.pattern.permute.xlu0 1
          %410 = vperm.xlu0 %409, %v180
          %v411 = vpop.permute.xlu0 %410
          %v413 = vperm.slane %v210, 1
          %v414 = vmul.f32 %v411, %v413
          %v415 = vadd.f32 %v408, %v414
          %417 = vset.pattern.permute.xlu0 0
          %418 = vperm.xlu0 %417, %v395
          %v419 = vpop.permute.xlu0 %418
          %v421 = vmul.f32 %v415, %v419
          %423 = vset.pattern.permute.xlu0 1
          %424 = vperm.xlu0 %423, %v401
          %v425 = vpop.permute.xlu0 %424
          %v427 = vadd.f32 %v421, %v425
          %v428 = vmax.f32 %v427, 0.0
          %v429 = vld [vmem:[%s3] sm:$0xff]
          %v430 = vld [vmem:[%s3 + $0x8] sm:$0xff]
          %vm431 = vcmask 64512
          %v433 = vsel %vm431, %v429, 0
          %v436 = vsel %vm431, %v430, 0
          %438 = vmatpush.msra.mxu0 0.0
          %439 = vmatpush.msra.mxu0 0.0
          %440 = vmatpush.msra.mxu0 0.0
          %441 = vmatpush.msra.mxu0 0.0
          %442 = vmatpush.msra.mxu0 0.0
          %443 = vmatpush.msra.mxu0 0.0
          %444 = vmatpush.msra.mxu0 0.0
          %445 = vmatpush.msra.mxu0 0.0
          %446 = vmatpush.msra.mxu0 0.0
          %447 = vmatpush.msra.mxu0 0.0
          %448 = vmatpush.msra.mxu0 0.0
          %449 = vmatpush.msra.mxu0 0.0
          %450 = vmatpush.msra.mxu0 0.0
          %451 = vmatpush.msra.mxu0 0.0
          %452 = vmatpush.msra.mxu0 0.0
          %453 = vmatpush.msra.mxu0 %v428
          %454 = vmatmul.f32.gmra.mxu0 %v433
          %v455 = vpop.f32.mrf.mxu0
          %v456 = vadd.f32 0.0, %v455
          %457 = vmatmul.f32.gmra.mxu0 %v436
          %v458 = vpop.f32.mrf.mxu0
          %v459 = vadd.f32 0.0, %v458
          %460 = vdwg.mxu0
          %v461 = vld [vmem:[#allocation4] sm:$0xff]
          %v462 = vld [vmem:[#allocation4 + $0x8] sm:$0xff]
          %v463 = vld [vmem:[#allocation5] sm:$0xff]
          %v464 = vld [vmem:[#allocation5 + $0x8] sm:$0xff]
          %v465 = vmul.f32 %v461, %v378
          %v466 = vmul.f32 %v462, %v378
          %v467 = vmul.f32 %v463, %v378
          %v468 = vmul.f32 %v464, %v378
          %v469 = vmul.f32 %v465, %v465
          %v470 = vmul.f32 %v466, %v466
          %v471 = vsub.f32 %v467, %v469
          %v472 = vsub.f32 %v468, %v470
          %v473 = vmax.f32 %v471, 0.0
          %v474 = vmax.f32 %v472, 0.0
          %v475 = vadd.f32 %v473, 1e-05
          %v476 = vadd.f32 %v474, 1e-05
          %v477 = vrsqrt.pop %v475
          %v478 = vmul.f32 %v477, %v475
          %v479 = vmul.f32 %v478, %v477
          %v480 = vmul.f32 0.5, %v479
          %v481 = vsub.f32 1.5, %v480
          %v482 = vmul.f32 %v477, %v481
          %vm483 = vweird.f32 %v475
          %vm484 = vweird.f32 %v477
          %vm485 = vmor %vm483, %vm484
          %v486 = vsel %vm485, %v477, %v482
          %v487 = vrsqrt.pop %v476
          %v488 = vmul.f32 %v487, %v476
          %v489 = vmul.f32 %v488, %v487
          %v490 = vmul.f32 0.5, %v489
          %v491 = vsub.f32 1.5, %v490
          %v492 = vmul.f32 %v487, %v491
          %vm493 = vweird.f32 %v476
          %vm494 = vweird.f32 %v487
          %vm495 = vmor %vm493, %vm494
          %v496 = vsel %vm495, %v487, %v492
          %499 = vrot.lane.b32.xlu0 %v486, 2
          %v500 = vpop.permute.xlu0 %499
          %501 = vrot.lane.b32.xlu0 %v496, 2
          %v502 = vpop.permute.xlu0 %501
          %v505 = vmul.f32 %v181, %v500
          %v506 = vmul.f32 %v182, %v502
          %509 = vrot.lane.b32.xlu0 %v505, 126
          %v510 = vpop.permute.xlu0 %509
          %511 = vrot.lane.b32.xlu0 %v506, 126
          %v512 = vpop.permute.xlu0 %511
          %v515 = vmul.f32 %v465, %v510
          %v516 = vmul.f32 %v466, %v512
          %519 = vrot.lane.b32.xlu0 %v515, 3
          %v520 = vpop.permute.xlu0 %519
          %521 = vrot.lane.b32.xlu0 %v516, 3
          %v522 = vpop.permute.xlu0 %521
          %v525 = vsub.f32 %v181, %v520
          %v526 = vsub.f32 %v182, %v522
          %527 = vset.pattern.permute.xlu0 2
          %528 = vperm.xlu0 %527, %v505
          %v529 = vpop.permute.xlu0 %528
          %531 = vset.pattern.permute.xlu0 2
          %532 = vperm.xlu0 %531, %v506
          %v533 = vpop.permute.xlu0 %532
          %v535 = vmul.f32 %v456, %v529
          %v536 = vmul.f32 %v459, %v533
          %538 = vset.pattern.permute.xlu0 3
          %539 = vperm.xlu0 %538, %v525
          %v540 = vpop.permute.xlu0 %539
          %543 = vset.pattern.permute.xlu0 3
          %544 = vperm.xlu0 %543, %v526
          %v545 = vpop.permute.xlu0 %544
          %v547 = vadd.f32 %v535, %v540
          %v548 = vadd.f32 %v536, %v545
          %v549 = vmax.f32 %v547, 0.0
          %v550 = vmax.f32 %v548, 0.0
          %v551 = vld [vmem:[%s3 + $0x10] sm:$0xff]
          %v552 = vld [vmem:[%s3 + $0x18] sm:$0xff]
          %v553 = vld [vmem:[%s3 + $0x20] sm:$0xff]
          %v554 = vld [vmem:[%s3 + $0x28] sm:$0xff]
          %556 = vset.pattern.permute.xlu0 4
          %557 = vperm.xlu0 %556, %v181
          %v558 = vpop.permute.xlu0 %557
          %561 = vset.pattern.permute.xlu0 4
          %562 = vperm.xlu0 %561, %v182
          %v563 = vpop.permute.xlu0 %562
          %566 = vset.pattern.permute.xlu0 4
          %567 = vperm.xlu0 %566, %v183
          %v568 = vpop.permute.xlu0 %567
          %571 = vset.pattern.permute.xlu0 4
          %572 = vperm.xlu0 %571, %v184
          %v573 = vpop.permute.xlu0 %572
          %vm575 = vcmask 130048
          %v577 = vsel %vm575, %v551, 0
          %v580 = vsel %vm575, %v552, 0
          %v583 = vsel %vm575, %v553, 0
          %v586 = vsel %vm575, %v554, 0
          %588 = vmatpush.msra.mxu0 0.0
          %589 = vmatpush.msra.mxu0 0.0
          %590 = vmatpush.msra.mxu0 0.0
          %591 = vmatpush.msra.mxu0 0.0
          %592 = vmatpush.msra.mxu0 0.0
          %593 = vmatpush.msra.mxu0 0.0
          %594 = vmatpush.msra.mxu0 0.0
          %595 = vmatpush.msra.mxu0 0.0
          %596 = vmatpush.msra.mxu0 0.0
          %597 = vmatpush.msra.mxu0 0.0
          %598 = vmatpush.msra.mxu0 0.0
          %599 = vmatpush.msra.mxu0 0.0
          %600 = vmatpush.msra.mxu0 0.0
          %601 = vmatpush.msra.mxu0 0.0
          %602 = vmatpush.msra.mxu0 %v550
          %603 = vmatpush.msra.mxu0 %v549
          %604 = vmatmul.f32.gmra.mxu0 %v577
          %v605 = vpop.f32.mrf.mxu0
          %v606 = vadd.f32 %v558, %v605
          %607 = vmatmul.f32.gmra.mxu0 %v580
          %v608 = vpop.f32.mrf.mxu0
          %v609 = vadd.f32 %v563, %v608
          %610 = vmatmul.f32.gmra.mxu0 %v583
          %v611 = vpop.f32.mrf.mxu0
          %v612 = vadd.f32 %v568, %v611
          %613 = vmatmul.f32.gmra.mxu0 %v586
          %v614 = vpop.f32.mrf.mxu0
          %v615 = vadd.f32 %v573, %v614
          %616 = vdwg.mxu0
          %617 = vst [vmem:[%s175] sm:$0xff] %v606
          %618 = vst [vmem:[%s175 + $0x8] sm:$0xff] %v609
          %619 = vst [vmem:[%s175 + $0x10] sm:$0xff] %v612
          %620 = vst [vmem:[%s175 + $0x18] sm:$0xff] %v615
        $region48: #{tpu_custom_call.1} parent=31 // pred_fallthru
          _
        %s621 = sand.u32 %s107, 1
        %s622 = scalar_lea.sflag [#allocation9], %s621
        %s623 = sand.u32 %s107, 1
        %s624 = smul.addr %s623, 32
        %s625 = scalar_lea.vmem [#allocation8], %s624
        // Predicated region
        $region49: #{tpu_custom_call.1} parent=31 // pred_check
          %p626 = pneg %p117
        $region50: #{tpu_custom_call.1} parent=31 // pred_check_branch
          %628 = sbr.rel (%p626) target = $region52
        $region51: #{tpu_custom_call.1} parent=31 // pred_region
          %630 = vsyncadd %s622, 0
          %s631 = smul.addr %s24, 8
          %s632 = scalar_lea.hbm %s4, %s631
          %s633 = sshll.u32 %s625, 4
          %s634 = int_to_ptr.vmem [resolvable:$true] %s633
          %s635 = sshll.u32 %s632, 4
          %s636 = int_to_ptr.hbm [resolvable:$true] %s635
          %641 = dma.vmem_to_hbm [thread:$0]  %s634, 512, %s636, %s622, 128, 256, 8
        $region52: #{tpu_custom_call.1} parent=31 // pred_fallthru
          _
      $region32: #{tpu_custom_call.1} parent=5 // pred_fallthru
        _
      %p642 = scmp.le.s32.totalorder 2, %s14
      // Predicated region
      $region53: #{tpu_custom_call.1} parent=5 // pred_check
        %p643 = pneg %p642
      $region54: #{tpu_custom_call.1} parent=5 // pred_check_branch
        %645 = sbr.rel (%p643) target = $region56
      $region55: #{tpu_custom_call.1} parent=5 // pred_region
        %s646 = ssub.s32 %s14, 2
        // Predicated region
        $region57: #{tpu_custom_call.1} parent=55 // pred_check
          %p647 = pneg %p123
        $region58: #{tpu_custom_call.1} parent=55 // pred_check_branch
          %649 = sbr.rel (%p647) target = $region60
        $region59: #{tpu_custom_call.1} parent=55 // pred_region
          %s650 = sand.u32 %s108, 1
          %s651 = scalar_lea.sflag [#allocation9], %s650
          %s652 = sand.u32 %s108, 1
          %s653 = smul.addr %s652, 32
          %s654 = scalar_lea.vmem [#allocation8], %s653
          %656 = dma.done %s651, 512
        $region60: #{tpu_custom_call.1} parent=55 // pred_fallthru
          _
      $region56: #{tpu_custom_call.1} parent=5 // pred_fallthru
        _
    $region6: #{tpu_custom_call.1} parent=1 // loop_footer
      %s18 = sadd.s32 1, %s14
    $region7: #{tpu_custom_call.1} parent=1 // loop_footer_branch
      %13 = sbr.rel target = $region3
    $region8: #{tpu_custom_call.1} parent=1 // loop_exit
      _
    %657 = vsyncpa [#allocation9], 1
    %s658 = scalar_lea.sflag [#allocation9], 1
    %659 = vsyncpa %s658, 1

</llo_original>
